<compile_context>
chip_gen: v6e
topology: v6e:2x2x1
jax: 0.10.0
libtpu: 0.0.40
codegen_flags: <defaults>
</compile_context>

<pallas_src>
import jax
import jax.numpy as jnp
from jax.experimental import pallas as pl
from jax.experimental.pallas import tpu as pltpu


def _attention_kernel(x_ref, w1_ref, b1_ref, w2_ref, att_ref, wts_ref):
    # x_ref   : (TB, S, H) input block (TB batch elements per grid step)
    # w1_ref  : (H, H)     first Linear weight, (in, out) layout  -> x @ w1
    # b1_ref  : (1, H)     first Linear bias (f32)
    # w2_ref  : (H, 1)     second Linear weight as a column
    # att_ref : (TB, H)    attended output
    # wts_ref : (TB, S)    attention weights (lane-dense; reshaped to (B,S,1) in wrapper)
    TB, S, H = x_ref.shape
    cdt = w1_ref.dtype                                   # MXU operand dtype (f32 or bf16)

    x3 = x_ref[...]                                      # (TB, S, H), already in cdt
    x2 = x3.reshape(TB * S, H)                           # one flattened MXU matmul for Linear1

    # Linear1 + tanh: f32 accumulation, f32 elementwise (v5e-safe).
    h = jnp.tanh(
        jnp.dot(x2, w1_ref[...], preferred_element_type=jnp.float32) + b1_ref[...]
    )                                                    # (TB*S, H) f32

    # Linear2 (bias dropped: softmax over seq is shift-invariant => exact no-op).
    # Weight-resident, full-M MXU matmul instead of TB tiny batched matmuls.
    s_col = jnp.dot(h.astype(cdt), w2_ref[...],
                    preferred_element_type=jnp.float32)  # (TB*S, 1)
    scores = s_col.reshape(TB, S)                        # lane-dense: seq on lanes

    # Softmax over the sequence (lane) axis, f32 stats, exact normalization.
    m = jnp.max(scores, axis=-1, keepdims=True)          # (TB, 1)
    e = jnp.exp(scores - m)
    w3 = e / jnp.sum(e, axis=-1, keepdims=True)          # (TB, S) f32

    # Weighted sum on the MXU: (TB,1,S) x (TB,S,H) -> (TB,1,H)  (K=S sublanes, N=H lanes).
    att = jnp.einsum("bqs,bsh->bqh",
                     w3.reshape(TB, 1, S).astype(cdt), x3,
                     preferred_element_type=jnp.float32)

    att_ref[...] = att.reshape(TB, H).astype(att_ref.dtype)
    wts_ref[...] = w3.astype(wts_ref.dtype)


def _vmem_working_set_bytes(tb, seq, hidden, op_itemsize):
    """Rough VMEM bytes: resident operands + per-step (double-buffered) working set."""
    # Resident: w1 (double-buffered by the default pipeline) + b1/w2 (f32-ish, tiny).
    resident = 2 * hidden * hidden * op_itemsize + 4 * hidden * 4
    # Per step: double-buffered x block, double-buffered outputs, f32 temporaries (h, exp, acc).
    per_step = (2 * tb * seq * hidden * op_itemsize
                + 2 * tb * (hidden + seq) * 4
                + 3 * tb * seq * hidden * 4)
    return resident, per_step


def _pick_block_batch(batch, seq, hidden, op_itemsize, *,
                      vmem_budget_bytes=None, prefer_multi_step=False):
    """VMEM-budgeted batch tile.

    Legal tiles are multiples of 8 that divide `batch` (sublane-aligned output
    stores), plus `batch` itself (full-extent blocks are alignment-exempt).
    Picks the largest tile whose working set fits the budget (default ~32 MiB,
    i.e. half of v7x's 64 MiB VMEM), which also maximizes the MXU M dimension
    (tb*S rows) and the per-DMA transfer size.
    """
    if vmem_budget_bytes is None:
        vmem_budget_bytes = 32 * 1024 * 1024
    resident, per_one = _vmem_working_set_bytes(1, seq, hidden, op_itemsize)
    avail = max(vmem_budget_bytes - resident, per_one)
    tb_fit = max(1, avail // per_one)

    cands = [t for t in range(8, batch + 1, 8) if batch % t == 0]
    if batch not in cands:
        cands.append(batch)                      # full-extent block (alignment exempt)
    fitting = [t for t in cands if t <= tb_fit] or [min(cands)]

    if prefer_multi_step:                        # v7x: keep both TensorCores busy
        multi = [t for t in fitting if (batch // t) >= 2 and (batch // t) % 2 == 0]
        if multi:
            return max(multi)
    # Single-TC chips (v5e/v6e): largest tile that fits, even if one grid step.
    return max(fitting)


def attention_layer(x, w1, b1, w2, b2, *, block_batch=None, matmul_dtype=None,
                    vmem_budget_bytes=None, prefer_multi_step=False):
    """AttentionLayer forward.

    x  : (B, S, H) input
    w1 : (H, H)  first Linear weight in (in, out) layout (torch weight.T)
    b1 : (H,)    first Linear bias
    w2 : (H,)    second Linear weight (Linear(H, 1).weight row)
    b2 : scalar  second Linear bias (exact no-op under the seq softmax; accepted
                 for API parity but not used)
    matmul_dtype : optional (e.g. jnp.bfloat16) MXU operand dtype; accumulation,
                   tanh and softmax stats stay float32.

    Returns (attended (B, H), attention_weights (B, S, 1)).
    """
    del b2                                        # softmax over seq is shift-invariant
    B, S, H = x.shape
    out_dtype = x.dtype
    cdt = jnp.dtype(matmul_dtype) if matmul_dtype is not None else jnp.dtype(x.dtype)

    if block_batch is None:
        block_batch = _pick_block_batch(B, S, H, cdt.itemsize,
                                        vmem_budget_bytes=vmem_budget_bytes,
                                        prefer_multi_step=prefer_multi_step)
    tb = block_batch
    assert B % tb == 0, f"block_batch={tb} must divide batch={B}"
    assert tb % 8 == 0 or tb == B, (
        f"block_batch={tb} must be a multiple of 8 or equal to batch={B} "
        "(sublane alignment of the output blocks)")

    # Cast operands exactly once on the host side (halves x HBM traffic for bf16).
    x_c = x.astype(cdt)
    w1_c = w1.astype(cdt)
    w2_c = w2.reshape(H, 1).astype(cdt)
    b1_2d = b1.reshape(1, H).astype(jnp.float32)

    resident, per_step = _vmem_working_set_bytes(tb, S, H, cdt.itemsize)
    vmem_limit = int(min(64 * 1024 * 1024,                       # v7x physical ceiling
                         max(32 * 1024 * 1024, 1.25 * (resident + per_step))))

    out_shapes = (
        jax.ShapeDtypeStruct((B, H), out_dtype),   # attended
        jax.ShapeDtypeStruct((B, S), out_dtype),   # lane-dense attention weights
    )
    attended, wts2d = pl.pallas_call(
        _attention_kernel,
        out_shape=out_shapes,
        grid=(B // tb,),
        in_specs=[
            pl.BlockSpec((tb, S, H), lambda b: (b, 0, 0)),   # x  (batched tile)
            pl.BlockSpec((H, H), lambda b: (0, 0)),          # w1 (grid-invariant)
            pl.BlockSpec((1, H), lambda b: (0, 0)),          # b1
            pl.BlockSpec((H, 1), lambda b: (0, 0)),          # w2 column
        ],
        out_specs=[
            pl.BlockSpec((tb, H), lambda b: (b, 0)),         # attended
            pl.BlockSpec((tb, S), lambda b: (b, 0)),         # attention weights
        ],
        compiler_params=pltpu.CompilerParams(
            dimension_semantics=("parallel",),
            vmem_limit_bytes=vmem_limit,
        ),
    )(x_c, w1_c, b1_2d, w2_c)
    return attended, wts2d.reshape(B, S, 1)


def _reference(x, w1, b1, w2, b2):
    # Pure-JAX reference mirroring the PyTorch forward.
    h = jnp.tanh(x @ w1 + b1)                     # (B, S, H)
    scores = h @ w2.reshape(-1, 1) + b2           # (B, S, 1)
    wts = jax.nn.softmax(scores, axis=1)          # softmax over seq
    attended = jnp.sum(wts * x, axis=1)           # (B, H)
    return attended, wts


if __name__ == "__main__":
    B, S, H = 4, 8, 32
    key = jax.random.PRNGKey(0)
    kx, k1, k2, k3, k4 = jax.random.split(key, 5)

    bound = 1.0 / jnp.sqrt(H)                     # PyTorch-Linear-like init bounds
    x = jax.random.normal(kx, (B, S, H), dtype=jnp.float32)
    w1 = jax.random.uniform(k1, (H, H), jnp.float32, -bound, bound)   # (in, out)
    b1 = jax.random.uniform(k2, (H,), jnp.float32, -bound, bound)
    w2 = jax.random.uniform(k3, (H,), jnp.float32, -bound, bound)
    b2 = jax.random.uniform(k4, (), jnp.float32, -bound, bound)

    ref_att, ref_wts = _reference(x, w1, b1, w2, b2)

    # f32 MXU-operand path (default). tb resolves to B=4 -> full-extent blocks.
    attended, weights = attention_layer(x, w1, b1, w2, b2)
    jax.block_until_ready((attended, weights))
    assert attended.shape == (B, H) and weights.shape == (B, S, 1)
    assert jnp.allclose(attended, ref_att, atol=2e-3, rtol=2e-3), (
        f"max err {jnp.max(jnp.abs(attended - ref_att))}")
    assert jnp.allclose(weights, ref_wts, atol=2e-3, rtol=2e-3), (
        f"max err {jnp.max(jnp.abs(weights - ref_wts))}")

    # bf16 MXU-operand path (v5e/v6e/v7x MXU rate); accumulation/softmax stay f32.
    att_bf, wts_bf = attention_layer(x, w1, b1, w2, b2, matmul_dtype=jnp.bfloat16)
    jax.block_until_ready((att_bf, wts_bf))
    assert jnp.allclose(att_bf, ref_att, atol=5e-2, rtol=5e-2)
    assert jnp.allclose(wts_bf, ref_wts, atol=5e-2, rtol=5e-2)

    print("KERNEL_OK")
</pallas_src>

<mosaic_0001>
module attributes {stable_mosaic.version = 11 : i64} {
  func.func @_attention_kernel(%arg0: i32, %arg1: memref<4x8x32xf32, #tpu.memory_space<vmem>>, %arg2: memref<32x32xf32, #tpu.memory_space<vmem>>, %arg3: memref<1x32xf32, #tpu.memory_space<vmem>>, %arg4: memref<32x1xf32, #tpu.memory_space<vmem>>, %arg5: memref<4x32xf32, #tpu.memory_space<vmem>>, %arg6: memref<4x8xf32, #tpu.memory_space<vmem>>) attributes {dimension_semantics = [#tpu.dimension_semantics<parallel>], iteration_bounds = array<i64: 1>, scalar_prefetch = 0 : i64, scratch_operands = 0 : i64, tpu.core_type = #tpu.core_type<tc>, window_params = [{transform_indices = @transform_0, window_bounds = array<i64: 4, 8, 32>}, {pipeline_mode = #tpu.pipeline_mode<synchronous>, transform_indices = @transform_1, window_bounds = array<i64: 32, 32>}, {pipeline_mode = #tpu.pipeline_mode<synchronous>, transform_indices = @transform_2, window_bounds = array<i64: 1, 32>}, {pipeline_mode = #tpu.pipeline_mode<synchronous>, transform_indices = @transform_3, window_bounds = array<i64: 32, 1>}, {transform_indices = @transform_4, window_bounds = array<i64: 4, 32>}, {transform_indices = @transform_5, window_bounds = array<i64: 4, 8>}]} {
    %c0 = arith.constant 0 : index
    %c0_0 = arith.constant 0 : index
    %c0_1 = arith.constant 0 : index
    %0 = vector.load %arg1[%c0, %c0_0, %c0_1] : memref<4x8x32xf32, #tpu.memory_space<vmem>>, vector<4x8x32xf32>
    %1 = vector.shape_cast %0 : vector<4x8x32xf32> to vector<32x32xf32>
    %c0_2 = arith.constant 0 : index
    %c0_3 = arith.constant 0 : index
    %2 = vector.load %arg2[%c0_2, %c0_3] : memref<32x32xf32, #tpu.memory_space<vmem>>, vector<32x32xf32>
    %cst = arith.constant dense<0.000000e+00> : vector<32x32xf32>
    %3 = tpu.matmul %1, %2, %cst {dimension_numbers = #tpu.dot_dimension_numbers<[1], [0], [0], [1], [0, 0, 1, 1], [], []>} : vector<32x32xf32>, vector<32x32xf32>, vector<32x32xf32> -> vector<32x32xf32>
    %c0_4 = arith.constant 0 : index
    %c0_5 = arith.constant 0 : index
    %4 = vector.load %arg3[%c0_4, %c0_5] : memref<1x32xf32, #tpu.memory_space<vmem>>, vector<1x32xf32>
    %5 = vector.broadcast %4 : vector<1x32xf32> to vector<32x32xf32>
    %6 = arith.addf %3, %5 : vector<32x32xf32>
    %7 = math.tanh %6 : vector<32x32xf32>
    %c0_6 = arith.constant 0 : index
    %c0_7 = arith.constant 0 : index
    %8 = vector.load %arg4[%c0_6, %c0_7] : memref<32x1xf32, #tpu.memory_space<vmem>>, vector<32x1xf32>
    %cst_8 = arith.constant dense<0.000000e+00> : vector<32x1xf32>
    %9 = tpu.matmul %7, %8, %cst_8 {dimension_numbers = #tpu.dot_dimension_numbers<[1], [0], [0], [1], [0, 0, 1, 1], [], []>} : vector<32x32xf32>, vector<32x1xf32>, vector<32x1xf32> -> vector<32x1xf32>
    %10 = vector.shape_cast %9 : vector<32x1xf32> to vector<4x8xf32>
    %cst_9 = arith.constant dense<0xFF800000> : vector<4xf32>
    %11 = vector.multi_reduction <maximumf>, %10, %cst_9 [1] : vector<4x8xf32> to vector<4xf32>
    %12 = vector.shape_cast %11 : vector<4xf32> to vector<4x1xf32>
    %13 = vector.broadcast %12 : vector<4x1xf32> to vector<4x8xf32>
    %14 = arith.subf %10, %13 : vector<4x8xf32>
    %15 = math.exp %14 : vector<4x8xf32>
    %cst_10 = arith.constant dense<0.000000e+00> : vector<4xf32>
    %16 = vector.multi_reduction <add>, %15, %cst_10 [1] : vector<4x8xf32> to vector<4xf32>
    %17 = vector.shape_cast %16 : vector<4xf32> to vector<4x1xf32>
    %18 = vector.broadcast %17 : vector<4x1xf32> to vector<4x8xf32>
    %19 = arith.divf %15, %18 : vector<4x8xf32>
    %20 = vector.shape_cast %19 : vector<4x8xf32> to vector<4x1x8xf32>
    "tpu.trace_start"() <{level = 10 : i32, message = "bqs,bsh->bqh"}> : () -> ()
    %cst_11 = arith.constant dense<0.000000e+00> : vector<4x1x32xf32>
    %21 = tpu.matmul %20, %0, %cst_11 {dimension_numbers = #tpu.dot_dimension_numbers<[2], [1], [1], [2], [0, 0, 0, 1, 1, 2], [0], [0]>} : vector<4x1x8xf32>, vector<4x8x32xf32>, vector<4x1x32xf32> -> vector<4x1x32xf32>
    "tpu.trace_stop"() : () -> ()
    %22 = vector.shape_cast %21 : vector<4x1x32xf32> to vector<4x32xf32>
    %c0_12 = arith.constant 0 : index
    %c0_13 = arith.constant 0 : index
    %23 = vector.load %arg5[%c0_12, %c0_13] : memref<4x32xf32, #tpu.memory_space<vmem>>, vector<4x32xf32>
    tpu.vector_store %arg5[%c0_12, %c0_13], %22 {strides = array<i32>} : memref<4x32xf32, #tpu.memory_space<vmem>>, vector<4x32xf32>,
    %c0_14 = arith.constant 0 : index
    %c0_15 = arith.constant 0 : index
    %24 = vector.load %arg6[%c0_14, %c0_15] : memref<4x8xf32, #tpu.memory_space<vmem>>, vector<4x8xf32>
    tpu.vector_store %arg6[%c0_14, %c0_15], %19 {strides = array<i32>} : memref<4x8xf32, #tpu.memory_space<vmem>>, vector<4x8xf32>,
    return
  }
  func.func @transform_0(%arg0: i32) -> (i32, i32, i32) {
    %c0_i32 = arith.constant 0 : i32
    %c0_i32_0 = arith.constant 0 : i32
    %c0_i32_1 = arith.constant 0 : i32
    return %arg0, %c0_i32, %c0_i32_0 : i32, i32, i32
  }
  func.func @transform_1(%arg0: i32) -> (i32, i32) {
    %c0_i32 = arith.constant 0 : i32
    %c0_i32_0 = arith.constant 0 : i32
    %c0_i32_1 = arith.constant 0 : i32
    return %c0_i32, %c0_i32_0 : i32, i32
  }
  func.func @transform_2(%arg0: i32) -> (i32, i32) {
    %c0_i32 = arith.constant 0 : i32
    %c0_i32_0 = arith.constant 0 : i32
    %c0_i32_1 = arith.constant 0 : i32
    return %c0_i32, %c0_i32_0 : i32, i32
  }
  func.func @transform_3(%arg0: i32) -> (i32, i32) {
    %c0_i32 = arith.constant 0 : i32
    %c0_i32_0 = arith.constant 0 : i32
    %c0_i32_1 = arith.constant 0 : i32
    return %c0_i32, %c0_i32_0 : i32, i32
  }
  func.func @transform_4(%arg0: i32) -> (i32, i32) {
    %c0_i32 = arith.constant 0 : i32
    %c0_i32_0 = arith.constant 0 : i32
    return %arg0, %c0_i32 : i32, i32
  }
  func.func @transform_5(%arg0: i32) -> (i32, i32) {
    %c0_i32 = arith.constant 0 : i32
    %c0_i32_0 = arith.constant 0 : i32
    return %arg0, %c0_i32 : i32, i32
  }
}

</mosaic_0001>

<llo_original>
// kernel: tpu_custom_call.1
$region0: #{tpu_custom_call.1}
  #allocation0 [shape = 'u32[]', space=smem, size = 0x4, offset = 0x4, fixed_abs, tag = 'smem constant byte address 0x4 - core index']
  #allocation1 [shape = 'u32[144,128]{1,0:T(1,128)}', space=vmem, size = 0x12000, scoped, tag = 'internal scratch']
  %s0 = inlined_call_operand.vmem [shape: f32[4,8,32], index: 0, kind: input, shape index: {}]
  %s1 = inlined_call_operand.hbm [shape: f32[32,32], index: 1, kind: input, shape index: {}]
  %s2 = inlined_call_operand.vmem [shape: f32[1,32], index: 2, kind: input, shape index: {}]
  %s3 = inlined_call_operand.vmem [shape: f32[32,1], index: 3, kind: input, shape index: {}]
  %s4 = inlined_call_operand.hbm [shape: f32[4,32], index: 4, kind: output, shape index: {0}]
  %s5 = inlined_call_operand.hbm [shape: f32[4,8], index: 5, kind: output, shape index: {1}]
  %6 = xla_tuple %s4, %s5
  %s7 = sld [smem:[#allocation0]]
  $region38: #{tpu_custom_call.1} parent=0
    _
  %s9 = ssub.s32 1, %s7
  %s10 = scalar_select 0, %s9, %s7
  $region1: #{tpu_custom_call.1} parent=0
    #allocation2 [shape = 'u8[16384]{0}', space=vmem, size = 0x4000, scoped, tag = 'input window, operand 1, single buffered']
    #allocation3 [shape = 's32[1]{0}', space=sflag, size = 0x4, scoped, tag = 'scoped memory for tpu_custom_call.1']
    #allocation4 [shape = 's32[1]{0}', space=sflag, size = 0x4, scoped, tag = 'scoped memory for tpu_custom_call.1']
    #allocation5 [shape = 'u8[2048]{0}', space=vmem, size = 0x800, scoped, tag = 'output window, operand 0, single buffered']
    #allocation6 [shape = 'u8[2048]{0}', space=vmem, size = 0x800, scoped, tag = 'output window, operand 1, single buffered']
    #allocation7 [shape = 's32[1]{0}', space=sflag, size = 0x4, scoped, tag = 'scoped memory for tpu_custom_call.1']
    %11 = vsyncpa [#allocation3], 0
    %12 = vsyncpa [#allocation4], 0
    %13 = vsyncpa [#allocation7], 0
    // Predicated region
    $region2: #{tpu_custom_call.1} parent=1 // pred_check
      _
    $region3: #{tpu_custom_call.1} parent=1 // pred_check_branch
      %15 = sbr.rel (0) target = $region5
    $region4: #{tpu_custom_call.1} parent=1 // pred_region
      _
    $region5: #{tpu_custom_call.1} parent=1 // pred_fallthru
      _
    // Predicated region
    $region6: #{tpu_custom_call.1} parent=1 // pred_check
      _
    $region7: #{tpu_custom_call.1} parent=1 // pred_check_branch
      %17 = sbr.rel (0) target = $region9
    $region8: #{tpu_custom_call.1} parent=1 // pred_region
      %s19 = ssub.s32 512, 512
      %20 = vsyncadd [#allocation3], %s19
      %s21 = sshll.u32 [#allocation2], 4
      %s22 = int_to_ptr.vmem [resolvable:$true] %s21
      %27 = dma.hbm_to_vmem [thread:$0]  %s1, 512, %s22, [#allocation3], 128, 128, 8
    $region9: #{tpu_custom_call.1} parent=1 // pred_fallthru
      _
    // Predicated region
    $region10: #{tpu_custom_call.1} parent=1 // pred_check
      _
    $region11: #{tpu_custom_call.1} parent=1 // pred_check_branch
      %29 = sbr.rel (0) target = $region13
    $region12: #{tpu_custom_call.1} parent=1 // pred_region
      _
    $region13: #{tpu_custom_call.1} parent=1 // pred_fallthru
      _
    // Predicated region
    $region14: #{tpu_custom_call.1} parent=1 // pred_check
      _
    $region15: #{tpu_custom_call.1} parent=1 // pred_check_branch
      %31 = sbr.rel (0) target = $region17
    $region16: #{tpu_custom_call.1} parent=1 // pred_region
      _
    $region17: #{tpu_custom_call.1} parent=1 // pred_fallthru
      _
    // Predicated region
    $region18: #{tpu_custom_call.1} parent=1 // pred_check
      _
    $region19: #{tpu_custom_call.1} parent=1 // pred_check_branch
      %33 = sbr.rel (0) target = $region21
    $region20: #{tpu_custom_call.1} parent=1 // pred_region
      %34 = dma.done [#allocation3], 512
    $region21: #{tpu_custom_call.1} parent=1 // pred_fallthru
      _
    %v35 = vld [vmem:[%s0] sm:$0xff]
    %v36 = vld [vmem:[%s0 + $0x8] sm:$0xff]
    %v37 = vld [vmem:[%s0 + $0x10] sm:$0xff]
    %v38 = vld [vmem:[%s0 + $0x18] sm:$0xff]
    %v39 = vld [vmem:[#allocation2] sm:$0xff]
    %v40 = vld [vmem:[#allocation2 + $0x8] sm:$0xff]
    %v41 = vld [vmem:[#allocation2 + $0x10] sm:$0xff]
    %v42 = vld [vmem:[#allocation2 + $0x18] sm:$0xff]
    %v43 = vld [vmem:[%s2] sm:$0x1]
    %v45 = vlaneseq
    %v46 = vshrl.u32 %v45, 7
    %v47 = vsub.s32 0, %v46
    %v48 = vrot.slane %v43, %v47
    %vm50 = vcmask 261120
    %v52 = vsel %vm50, %v35, 0
    %v55 = vsel %vm50, %v36, 0
    %v58 = vsel %vm50, %v37, 0
    %v61 = vsel %vm50, %v38, 0
    %63 = vmatprep.subr.mxu0 0.0
    %64 = vmatpush1.msra.mxu0 0.0
    %65 = vmatprep.subr.mxu0 0.0
    %66 = vmatpush1.msra.mxu0 0.0
    %67 = vmatprep.subr.mxu0 0.0
    %68 = vmatpush1.msra.mxu0 0.0
    %69 = vmatprep.subr.mxu0 0.0
    %70 = vmatpush1.msra.mxu0 0.0
    %71 = vmatprep.subr.mxu0 0.0
    %72 = vmatpush1.msra.mxu0 0.0
    %73 = vmatprep.subr.mxu0 0.0
    %74 = vmatpush1.msra.mxu0 0.0
    %75 = vmatprep.subr.mxu0 0.0
    %76 = vmatpush1.msra.mxu0 0.0
    %77 = vmatprep.subr.mxu0 0.0
    %78 = vmatpush1.msra.mxu0 0.0
    %79 = vmatprep.subr.mxu0 0.0
    %80 = vmatpush1.msra.mxu0 0.0
    %81 = vmatprep.subr.mxu0 0.0
    %82 = vmatpush1.msra.mxu0 0.0
    %83 = vmatprep.subr.mxu0 0.0
    %84 = vmatpush1.msra.mxu0 0.0
    %85 = vmatprep.subr.mxu0 0.0
    %86 = vmatpush1.msra.mxu0 0.0
    %87 = vmatprep.subr.mxu0 0.0
    %88 = vmatpush1.msra.mxu0 %v42
    %89 = vmatprep.subr.mxu0 0.0
    %90 = vmatpush1.msra.mxu0 %v41
    %91 = vmatprep.subr.mxu0 0.0
    %92 = vmatpush1.msra.mxu0 %v40
    %93 = vmatprep.subr.mxu0 0.0
    %94 = vmatpush1.msra.mxu0 %v39
    %95 = vmatprep.subr.mxu0 0.0
    %96 = vmatpush2.msra.mxu0 0.0
    %97 = vmatprep.subr.mxu0 0.0
    %98 = vmatpush2.msra.mxu0 0.0
    %99 = vmatprep.subr.mxu0 0.0
    %100 = vmatpush2.msra.mxu0 0.0
    %101 = vmatprep.subr.mxu0 0.0
    %102 = vmatpush2.msra.mxu0 0.0
    %103 = vmatprep.subr.mxu0 0.0
    %104 = vmatpush2.msra.mxu0 0.0
    %105 = vmatprep.subr.mxu0 0.0
    %106 = vmatpush2.msra.mxu0 0.0
    %107 = vmatprep.subr.mxu0 0.0
    %108 = vmatpush2.msra.mxu0 0.0
    %109 = vmatprep.subr.mxu0 0.0
    %110 = vmatpush2.msra.mxu0 0.0
    %111 = vmatprep.subr.mxu0 0.0
    %112 = vmatpush2.msra.mxu0 0.0
    %113 = vmatprep.subr.mxu0 0.0
    %114 = vmatpush2.msra.mxu0 0.0
    %115 = vmatprep.subr.mxu0 0.0
    %116 = vmatpush2.msra.mxu0 0.0
    %117 = vmatprep.subr.mxu0 0.0
    %118 = vmatpush2.msra.mxu0 0.0
    %119 = vmatprep.subr.mxu0 0.0
    %120 = vmatpush2.msra.mxu0 0.0
    %121 = vmatprep.subr.mxu0 0.0
    %122 = vmatpush2.msra.mxu0 0.0
    %123 = vmatprep.subr.mxu0 0.0
    %124 = vmatpush2.msra.mxu0 0.0
    %125 = vmatprep.subr.mxu0 0.0
    %126 = vmatpush2.msra.mxu0 0.0
    %127 = vmatprep.mubr.f32.mxu0 0.0
    %128 = vmatmul.mubr.f32.gmra.mxu0 %v52
    %v129 = vpop.f32.mrf.mxu0
    %v130 = vadd.f32 %v48, %v129
    %v131 = vpop.f32.mrf.mxu0
    %132 = vmatprep.mubr.f32.mxu0 0.0
    %133 = vmatmul.mubr.f32.gmra.mxu0 %v55
    %v134 = vpop.f32.mrf.mxu0
    %v135 = vadd.f32 %v48, %v134
    %v136 = vpop.f32.mrf.mxu0
    %137 = vmatprep.mubr.f32.mxu0 0.0
    %138 = vmatmul.mubr.f32.gmra.mxu0 %v58
    %v139 = vpop.f32.mrf.mxu0
    %v140 = vadd.f32 %v48, %v139
    %v141 = vpop.f32.mrf.mxu0
    %142 = vmatprep.mubr.f32.mxu0 0.0
    %143 = vmatmul.mubr.f32.gmra.mxu0 %v61
    %v144 = vpop.f32.mrf.mxu0
    %v145 = vadd.f32 %v48, %v144
    %v146 = vpop.f32.mrf.mxu0
    %147 = vdwg.mxu0
    %v148 = vtanh.pop %v130
    %v149 = vtanh.pop %v135
    %v150 = vtanh.pop %v140
    %v151 = vtanh.pop %v145
    %v152 = vld [vmem:[%s3] sm:$0xff]
    %v153 = vld [vmem:[%s3 + $0x8] sm:$0xff]
    %v154 = vld [vmem:[%s3 + $0x10] sm:$0xff]
    %v155 = vld [vmem:[%s3 + $0x18] sm:$0xff]
    %v157 = vsel %vm50, %v148, 0
    %v160 = vsel %vm50, %v149, 0
    %v163 = vsel %vm50, %v150, 0
    %v166 = vsel %vm50, %v151, 0
    %168 = vmatprep.subr.mxu0 0.0
    %169 = vmatpush1.msra.mxu0 0.0
    %170 = vmatprep.subr.mxu0 0.0
    %171 = vmatpush1.msra.mxu0 0.0
    %172 = vmatprep.subr.mxu0 0.0
    %173 = vmatpush1.msra.mxu0 0.0
    %174 = vmatprep.subr.mxu0 0.0
    %175 = vmatpush1.msra.mxu0 0.0
    %176 = vmatprep.subr.mxu0 0.0
    %177 = vmatpush1.msra.mxu0 0.0
    %178 = vmatprep.subr.mxu0 0.0
    %179 = vmatpush1.msra.mxu0 0.0
    %180 = vmatprep.subr.mxu0 0.0
    %181 = vmatpush1.msra.mxu0 0.0
    %182 = vmatprep.subr.mxu0 0.0
    %183 = vmatpush1.msra.mxu0 0.0
    %184 = vmatprep.subr.mxu0 0.0
    %185 = vmatpush1.msra.mxu0 0.0
    %186 = vmatprep.subr.mxu0 0.0
    %187 = vmatpush1.msra.mxu0 0.0
    %188 = vmatprep.subr.mxu0 0.0
    %189 = vmatpush1.msra.mxu0 0.0
    %190 = vmatprep.subr.mxu0 0.0
    %191 = vmatpush1.msra.mxu0 0.0
    %192 = vmatprep.subr.mxu0 0.0
    %193 = vmatpush1.msra.mxu0 %v155
    %194 = vmatprep.subr.mxu0 0.0
    %195 = vmatpush1.msra.mxu0 %v154
    %196 = vmatprep.subr.mxu0 0.0
    %197 = vmatpush1.msra.mxu0 %v153
    %198 = vmatprep.subr.mxu0 0.0
    %199 = vmatpush1.msra.mxu0 %v152
    %200 = vmatprep.subr.mxu0 0.0
    %201 = vmatpush2.msra.mxu0 0.0
    %202 = vmatprep.subr.mxu0 0.0
    %203 = vmatpush2.msra.mxu0 0.0
    %204 = vmatprep.subr.mxu0 0.0
    %205 = vmatpush2.msra.mxu0 0.0
    %206 = vmatprep.subr.mxu0 0.0
    %207 = vmatpush2.msra.mxu0 0.0
    %208 = vmatprep.subr.mxu0 0.0
    %209 = vmatpush2.msra.mxu0 0.0
    %210 = vmatprep.subr.mxu0 0.0
    %211 = vmatpush2.msra.mxu0 0.0
    %212 = vmatprep.subr.mxu0 0.0
    %213 = vmatpush2.msra.mxu0 0.0
    %214 = vmatprep.subr.mxu0 0.0
    %215 = vmatpush2.msra.mxu0 0.0
    %216 = vmatprep.subr.mxu0 0.0
    %217 = vmatpush2.msra.mxu0 0.0
    %218 = vmatprep.subr.mxu0 0.0
    %219 = vmatpush2.msra.mxu0 0.0
    %220 = vmatprep.subr.mxu0 0.0
    %221 = vmatpush2.msra.mxu0 0.0
    %222 = vmatprep.subr.mxu0 0.0
    %223 = vmatpush2.msra.mxu0 0.0
    %224 = vmatprep.subr.mxu0 0.0
    %225 = vmatpush2.msra.mxu0 0.0
    %226 = vmatprep.subr.mxu0 0.0
    %227 = vmatpush2.msra.mxu0 0.0
    %228 = vmatprep.subr.mxu0 0.0
    %229 = vmatpush2.msra.mxu0 0.0
    %230 = vmatprep.subr.mxu0 0.0
    %231 = vmatpush2.msra.mxu0 0.0
    %232 = vmatprep.mubr.f32.mxu0 0.0
    %233 = vmatmul.mubr.f32.gmra.mxu0 %v157
    %v234 = vpop.f32.mrf.mxu0
    %v235 = vadd.f32 0.0, %v234
    %v236 = vpop.f32.mrf.mxu0
    %237 = vmatprep.mubr.f32.mxu0 0.0
    %238 = vmatmul.mubr.f32.gmra.mxu0 %v160
    %v239 = vpop.f32.mrf.mxu0
    %v240 = vadd.f32 0.0, %v239
    %v241 = vpop.f32.mrf.mxu0
    %242 = vmatprep.mubr.f32.mxu0 0.0
    %243 = vmatmul.mubr.f32.gmra.mxu0 %v163
    %v244 = vpop.f32.mrf.mxu0
    %v245 = vadd.f32 0.0, %v244
    %v246 = vpop.f32.mrf.mxu0
    %247 = vmatprep.mubr.f32.mxu0 0.0
    %248 = vmatmul.mubr.f32.gmra.mxu0 %v166
    %v249 = vpop.f32.mrf.mxu0
    %v250 = vadd.f32 0.0, %v249
    %v251 = vpop.f32.mrf.mxu0
    %252 = vdwg.mxu0
    %257 = vset.pattern.permute.xlu0 0
    %258 = vperm.xlu0 %257, %v235
    %v259 = vpop.permute.xlu0 %258
    %260 = vset.pattern.permute.xlu0 0
    %261 = vperm.xlu0 %260, %v240
    %v262 = vpop.permute.xlu0 %261
    %263 = vset.pattern.permute.xlu0 0
    %264 = vperm.xlu0 %263, %v245
    %v265 = vpop.permute.xlu0 %264
    %266 = vset.pattern.permute.xlu0 0
    %267 = vperm.xlu0 %266, %v250
    %v268 = vpop.permute.xlu0 %267
    %v269 = vlaneseq
    %v270 = vand.u32 %v269, 127
    %v271 = vlaneseq
    %v272 = vshrl.u32 %v271, 7
    %v273 = vsub.s32 %v270, %v272
    %v274 = vrot.slane %v259, %v273
    %v275 = vlaneseq
    %v276 = vshrl.u32 %v275, 7
    %v277 = vsub.s32 %v270, %v276
    %v278 = vrot.slane %v262, %v277
    %v279 = vlaneseq
    %v280 = vshrl.u32 %v279, 7
    %v281 = vsub.s32 %v270, %v280
    %v282 = vrot.slane %v265, %v281
    %v283 = vlaneseq
    %v284 = vshrl.u32 %v283, 7
    %v285 = vsub.s32 %v270, %v284
    %v286 = vrot.slane %v268, %v285
    %vm287 = vcmask 1041409
    %v288 = vsel %vm287, %v278, %v274
    %vm289 = vcmask 1042434
    %v290 = vsel %vm289, %v282, %v288
    %vm291 = vcmask 1043459
    %v292 = vsel %vm291, %v286, %v290
    %vm294 = vcmask 60416
    %v295 = vsel %vm294, %v292, -inf
    %296 = vmax.xlane.f32.xlu0 %v295
    %v297 = vpop.xlane.xlu0 %296
    %v299 = vlaneseq
    %v300 = vshrl.u32 %v299, 7
    %v301 = vsub.s32 0, %v300
    %v302 = vrot.slane %v297, %v301
    %v303 = vlaneseq
    %v304 = vshrl.u32 %v303, 7
    %v305 = vsub.s32 1, %v304
    %v306 = vrot.slane %v297, %v305
    %v307 = vlaneseq
    %v308 = vshrl.u32 %v307, 7
    %v309 = vsub.s32 2, %v308
    %v310 = vrot.slane %v297, %v309
    %v311 = vlaneseq
    %v312 = vshrl.u32 %v311, 7
    %v313 = vsub.s32 3, %v312
    %v314 = vrot.slane %v297, %v313
    %v319 = vsub.f32 %v235, %v302
    %v320 = vsub.f32 %v240, %v306
    %v321 = vsub.f32 %v245, %v310
    %v322 = vsub.f32 %v250, %v314
    %v323 = vmul.f32 %v319, 1.442695
    %v324 = vpow.pop %v323
    %v325 = vmul.f32 %v320, 1.442695
    %v326 = vpow.pop %v325
    %v327 = vmul.f32 %v321, 1.442695
    %v328 = vpow.pop %v327
    %v329 = vmul.f32 %v322, 1.442695
    %v330 = vpow.pop %v329
    %335 = vset.pattern.permute.xlu0 0
    %336 = vperm.xlu0 %335, %v324
    %v337 = vpop.permute.xlu0 %336
    %338 = vset.pattern.permute.xlu0 0
    %339 = vperm.xlu0 %338, %v326
    %v340 = vpop.permute.xlu0 %339
    %341 = vset.pattern.permute.xlu0 0
    %342 = vperm.xlu0 %341, %v328
    %v343 = vpop.permute.xlu0 %342
    %344 = vset.pattern.permute.xlu0 0
    %345 = vperm.xlu0 %344, %v330
    %v346 = vpop.permute.xlu0 %345
    %v347 = vlaneseq
    %v348 = vshrl.u32 %v347, 7
    %v349 = vsub.s32 %v270, %v348
    %v350 = vrot.slane %v337, %v349
    %v351 = vlaneseq
    %v352 = vshrl.u32 %v351, 7
    %v353 = vsub.s32 %v270, %v352
    %v354 = vrot.slane %v340, %v353
    %v355 = vlaneseq
    %v356 = vshrl.u32 %v355, 7
    %v357 = vsub.s32 %v270, %v356
    %v358 = vrot.slane %v343, %v357
    %v359 = vlaneseq
    %v360 = vshrl.u32 %v359, 7
    %v361 = vsub.s32 %v270, %v360
    %v362 = vrot.slane %v346, %v361
    %v363 = vsel %vm287, %v354, %v350
    %v364 = vsel %vm289, %v358, %v363
    %v365 = vsel %vm291, %v362, %v364
    %v367 = vsel %vm294, %v365, 0.0
    %368 = vadd.xlane.f32.xlu0 %v367
    %v369 = vpop.xlane.xlu0 %368
    %v371 = vlaneseq
    %v372 = vshrl.u32 %v371, 7
    %v373 = vsub.s32 0, %v372
    %v374 = vrot.slane %v369, %v373
    %v375 = vlaneseq
    %v376 = vshrl.u32 %v375, 7
    %v377 = vsub.s32 1, %v376
    %v378 = vrot.slane %v369, %v377
    %v379 = vlaneseq
    %v380 = vshrl.u32 %v379, 7
    %v381 = vsub.s32 2, %v380
    %v382 = vrot.slane %v369, %v381
    %v383 = vlaneseq
    %v384 = vshrl.u32 %v383, 7
    %v385 = vsub.s32 3, %v384
    %v386 = vrot.slane %v369, %v385
    %v391 = vrcp.pop %v374
    %v392 = vmul.f32 %v324, %v391
    %v393 = vrcp.pop %v378
    %v394 = vmul.f32 %v326, %v393
    %v395 = vrcp.pop %v382
    %v396 = vmul.f32 %v328, %v395
    %v397 = vrcp.pop %v386
    %v398 = vmul.f32 %v330, %v397
    %400 = vset.pattern.permute.xlu0 0
    %401 = vperm.xlu0 %400, %v392
    %v402 = vpop.permute.xlu0 %401
    %v403 = vlaneseq
    %v404 = vshrl.u32 %v403, 7
    %v405 = vsub.s32 %v270, %v404
    %v406 = vrot.slane %v402, %v405
    %vm407 = vcmask 64512
    %v408 = vsel %vm407, %v406, 0
    %410 = vmatprep.subr.mxu0 0.0
    %411 = vmatpush1.msra.mxu0 0.0
    %412 = vmatprep.subr.mxu0 0.0
    %413 = vmatpush1.msra.mxu0 0.0
    %414 = vmatprep.subr.mxu0 0.0
    %415 = vmatpush1.msra.mxu0 0.0
    %416 = vmatprep.subr.mxu0 0.0
    %417 = vmatpush1.msra.mxu0 0.0
    %418 = vmatprep.subr.mxu0 0.0
    %419 = vmatpush1.msra.mxu0 0.0
    %420 = vmatprep.subr.mxu0 0.0
    %421 = vmatpush1.msra.mxu0 0.0
    %422 = vmatprep.subr.mxu0 0.0
    %423 = vmatpush1.msra.mxu0 0.0
    %424 = vmatprep.subr.mxu0 0.0
    %425 = vmatpush1.msra.mxu0 0.0
    %426 = vmatprep.subr.mxu0 0.0
    %427 = vmatpush1.msra.mxu0 0.0
    %428 = vmatprep.subr.mxu0 0.0
    %429 = vmatpush1.msra.mxu0 0.0
    %430 = vmatprep.subr.mxu0 0.0
    %431 = vmatpush1.msra.mxu0 0.0
    %432 = vmatprep.subr.mxu0 0.0
    %433 = vmatpush1.msra.mxu0 0.0
    %434 = vmatprep.subr.mxu0 0.0
    %435 = vmatpush1.msra.mxu0 0.0
    %436 = vmatprep.subr.mxu0 0.0
    %437 = vmatpush1.msra.mxu0 0.0
    %438 = vmatprep.subr.mxu0 0.0
    %439 = vmatpush1.msra.mxu0 0.0
    %440 = vmatprep.subr.mxu0 0.0
    %441 = vmatpush1.msra.mxu0 %v35
    %442 = vmatprep.subr.mxu0 0.0
    %443 = vmatpush2.msra.mxu0 0.0
    %444 = vmatprep.subr.mxu0 0.0
    %445 = vmatpush2.msra.mxu0 0.0
    %446 = vmatprep.subr.mxu0 0.0
    %447 = vmatpush2.msra.mxu0 0.0
    %448 = vmatprep.subr.mxu0 0.0
    %449 = vmatpush2.msra.mxu0 0.0
    %450 = vmatprep.subr.mxu0 0.0
    %451 = vmatpush2.msra.mxu0 0.0
    %452 = vmatprep.subr.mxu0 0.0
    %453 = vmatpush2.msra.mxu0 0.0
    %454 = vmatprep.subr.mxu0 0.0
    %455 = vmatpush2.msra.mxu0 0.0
    %456 = vmatprep.subr.mxu0 0.0
    %457 = vmatpush2.msra.mxu0 0.0
    %458 = vmatprep.subr.mxu0 0.0
    %459 = vmatpush2.msra.mxu0 0.0
    %460 = vmatprep.subr.mxu0 0.0
    %461 = vmatpush2.msra.mxu0 0.0
    %462 = vmatprep.subr.mxu0 0.0
    %463 = vmatpush2.msra.mxu0 0.0
    %464 = vmatprep.subr.mxu0 0.0
    %465 = vmatpush2.msra.mxu0 0.0
    %466 = vmatprep.subr.mxu0 0.0
    %467 = vmatpush2.msra.mxu0 0.0
    %468 = vmatprep.subr.mxu0 0.0
    %469 = vmatpush2.msra.mxu0 0.0
    %470 = vmatprep.subr.mxu0 0.0
    %471 = vmatpush2.msra.mxu0 0.0
    %472 = vmatprep.subr.mxu0 0.0
    %473 = vmatpush2.msra.mxu0 0.0
    %474 = vmatprep.mubr.f32.mxu0 0.0
    %475 = vmatmul.mubr.f32.gmra.mxu0 %v408
    %v476 = vpop.f32.mrf.mxu0
    %v477 = vadd.f32 0.0, %v476
    %v478 = vpop.f32.mrf.mxu0
    %479 = vdwg.mxu0
    %481 = vset.pattern.permute.xlu0 0
    %482 = vperm.xlu0 %481, %v394
    %v483 = vpop.permute.xlu0 %482
    %v484 = vlaneseq
    %v485 = vshrl.u32 %v484, 7
    %v486 = vsub.s32 %v270, %v485
    %v487 = vrot.slane %v483, %v486
    %v488 = vsel %vm407, %v487, 0
    %490 = vmatprep.subr.mxu0 0.0
    %491 = vmatpush1.msra.mxu0 0.0
    %492 = vmatprep.subr.mxu0 0.0
    %493 = vmatpush1.msra.mxu0 0.0
    %494 = vmatprep.subr.mxu0 0.0
    %495 = vmatpush1.msra.mxu0 0.0
    %496 = vmatprep.subr.mxu0 0.0
    %497 = vmatpush1.msra.mxu0 0.0
    %498 = vmatprep.subr.mxu0 0.0
    %499 = vmatpush1.msra.mxu0 0.0
    %500 = vmatprep.subr.mxu0 0.0
    %501 = vmatpush1.msra.mxu0 0.0
    %502 = vmatprep.subr.mxu0 0.0
    %503 = vmatpush1.msra.mxu0 0.0
    %504 = vmatprep.subr.mxu0 0.0
    %505 = vmatpush1.msra.mxu0 0.0
    %506 = vmatprep.subr.mxu0 0.0
    %507 = vmatpush1.msra.mxu0 0.0
    %508 = vmatprep.subr.mxu0 0.0
    %509 = vmatpush1.msra.mxu0 0.0
    %510 = vmatprep.subr.mxu0 0.0
    %511 = vmatpush1.msra.mxu0 0.0
    %512 = vmatprep.subr.mxu0 0.0
    %513 = vmatpush1.msra.mxu0 0.0
    %514 = vmatprep.subr.mxu0 0.0
    %515 = vmatpush1.msra.mxu0 0.0
    %516 = vmatprep.subr.mxu0 0.0
    %517 = vmatpush1.msra.mxu0 0.0
    %518 = vmatprep.subr.mxu0 0.0
    %519 = vmatpush1.msra.mxu0 0.0
    %520 = vmatprep.subr.mxu0 0.0
    %521 = vmatpush1.msra.mxu0 %v36
    %522 = vmatprep.subr.mxu0 0.0
    %523 = vmatpush2.msra.mxu0 0.0
    %524 = vmatprep.subr.mxu0 0.0
    %525 = vmatpush2.msra.mxu0 0.0
    %526 = vmatprep.subr.mxu0 0.0
    %527 = vmatpush2.msra.mxu0 0.0
    %528 = vmatprep.subr.mxu0 0.0
    %529 = vmatpush2.msra.mxu0 0.0
    %530 = vmatprep.subr.mxu0 0.0
    %531 = vmatpush2.msra.mxu0 0.0
    %532 = vmatprep.subr.mxu0 0.0
    %533 = vmatpush2.msra.mxu0 0.0
    %534 = vmatprep.subr.mxu0 0.0
    %535 = vmatpush2.msra.mxu0 0.0
    %536 = vmatprep.subr.mxu0 0.0
    %537 = vmatpush2.msra.mxu0 0.0
    %538 = vmatprep.subr.mxu0 0.0
    %539 = vmatpush2.msra.mxu0 0.0
    %540 = vmatprep.subr.mxu0 0.0
    %541 = vmatpush2.msra.mxu0 0.0
    %542 = vmatprep.subr.mxu0 0.0
    %543 = vmatpush2.msra.mxu0 0.0
    %544 = vmatprep.subr.mxu0 0.0
    %545 = vmatpush2.msra.mxu0 0.0
    %546 = vmatprep.subr.mxu0 0.0
    %547 = vmatpush2.msra.mxu0 0.0
    %548 = vmatprep.subr.mxu0 0.0
    %549 = vmatpush2.msra.mxu0 0.0
    %550 = vmatprep.subr.mxu0 0.0
    %551 = vmatpush2.msra.mxu0 0.0
    %552 = vmatprep.subr.mxu0 0.0
    %553 = vmatpush2.msra.mxu0 0.0
    %554 = vmatprep.mubr.f32.mxu0 0.0
    %555 = vmatmul.mubr.f32.gmra.mxu0 %v488
    %v556 = vpop.f32.mrf.mxu0
    %v557 = vadd.f32 0.0, %v556
    %v558 = vpop.f32.mrf.mxu0
    %559 = vdwg.mxu0
    %561 = vset.pattern.permute.xlu0 0
    %562 = vperm.xlu0 %561, %v396
    %v563 = vpop.permute.xlu0 %562
    %v564 = vlaneseq
    %v565 = vshrl.u32 %v564, 7
    %v566 = vsub.s32 %v270, %v565
    %v567 = vrot.slane %v563, %v566
    %v568 = vsel %vm407, %v567, 0
    %570 = vmatprep.subr.mxu0 0.0
    %571 = vmatpush1.msra.mxu0 0.0
    %572 = vmatprep.subr.mxu0 0.0
    %573 = vmatpush1.msra.mxu0 0.0
    %574 = vmatprep.subr.mxu0 0.0
    %575 = vmatpush1.msra.mxu0 0.0
    %576 = vmatprep.subr.mxu0 0.0
    %577 = vmatpush1.msra.mxu0 0.0
    %578 = vmatprep.subr.mxu0 0.0
    %579 = vmatpush1.msra.mxu0 0.0
    %580 = vmatprep.subr.mxu0 0.0
    %581 = vmatpush1.msra.mxu0 0.0
    %582 = vmatprep.subr.mxu0 0.0
    %583 = vmatpush1.msra.mxu0 0.0
    %584 = vmatprep.subr.mxu0 0.0
    %585 = vmatpush1.msra.mxu0 0.0
    %586 = vmatprep.subr.mxu0 0.0
    %587 = vmatpush1.msra.mxu0 0.0
    %588 = vmatprep.subr.mxu0 0.0
    %589 = vmatpush1.msra.mxu0 0.0
    %590 = vmatprep.subr.mxu0 0.0
    %591 = vmatpush1.msra.mxu0 0.0
    %592 = vmatprep.subr.mxu0 0.0
    %593 = vmatpush1.msra.mxu0 0.0
    %594 = vmatprep.subr.mxu0 0.0
    %595 = vmatpush1.msra.mxu0 0.0
    %596 = vmatprep.subr.mxu0 0.0
    %597 = vmatpush1.msra.mxu0 0.0
    %598 = vmatprep.subr.mxu0 0.0
    %599 = vmatpush1.msra.mxu0 0.0
    %600 = vmatprep.subr.mxu0 0.0
    %601 = vmatpush1.msra.mxu0 %v37
    %602 = vmatprep.subr.mxu0 0.0
    %603 = vmatpush2.msra.mxu0 0.0
    %604 = vmatprep.subr.mxu0 0.0
    %605 = vmatpush2.msra.mxu0 0.0
    %606 = vmatprep.subr.mxu0 0.0
    %607 = vmatpush2.msra.mxu0 0.0
    %608 = vmatprep.subr.mxu0 0.0
    %609 = vmatpush2.msra.mxu0 0.0
    %610 = vmatprep.subr.mxu0 0.0
    %611 = vmatpush2.msra.mxu0 0.0
    %612 = vmatprep.subr.mxu0 0.0
    %613 = vmatpush2.msra.mxu0 0.0
    %614 = vmatprep.subr.mxu0 0.0
    %615 = vmatpush2.msra.mxu0 0.0
    %616 = vmatprep.subr.mxu0 0.0
    %617 = vmatpush2.msra.mxu0 0.0
    %618 = vmatprep.subr.mxu0 0.0
    %619 = vmatpush2.msra.mxu0 0.0
    %620 = vmatprep.subr.mxu0 0.0
    %621 = vmatpush2.msra.mxu0 0.0
    %622 = vmatprep.subr.mxu0 0.0
    %623 = vmatpush2.msra.mxu0 0.0
    %624 = vmatprep.subr.mxu0 0.0
    %625 = vmatpush2.msra.mxu0 0.0
    %626 = vmatprep.subr.mxu0 0.0
    %627 = vmatpush2.msra.mxu0 0.0
    %628 = vmatprep.subr.mxu0 0.0
    %629 = vmatpush2.msra.mxu0 0.0
    %630 = vmatprep.subr.mxu0 0.0
    %631 = vmatpush2.msra.mxu0 0.0
    %632 = vmatprep.subr.mxu0 0.0
    %633 = vmatpush2.msra.mxu0 0.0
    %634 = vmatprep.mubr.f32.mxu0 0.0
    %635 = vmatmul.mubr.f32.gmra.mxu0 %v568
    %v636 = vpop.f32.mrf.mxu0
    %v637 = vadd.f32 0.0, %v636
    %v638 = vpop.f32.mrf.mxu0
    %639 = vdwg.mxu0
    %641 = vset.pattern.permute.xlu0 0
    %642 = vperm.xlu0 %641, %v398
    %v643 = vpop.permute.xlu0 %642
    %v644 = vlaneseq
    %v645 = vshrl.u32 %v644, 7
    %v646 = vsub.s32 %v270, %v645
    %v647 = vrot.slane %v643, %v646
    %v648 = vsel %vm407, %v647, 0
    %650 = vmatprep.subr.mxu0 0.0
    %651 = vmatpush1.msra.mxu0 0.0
    %652 = vmatprep.subr.mxu0 0.0
    %653 = vmatpush1.msra.mxu0 0.0
    %654 = vmatprep.subr.mxu0 0.0
    %655 = vmatpush1.msra.mxu0 0.0
    %656 = vmatprep.subr.mxu0 0.0
    %657 = vmatpush1.msra.mxu0 0.0
    %658 = vmatprep.subr.mxu0 0.0
    %659 = vmatpush1.msra.mxu0 0.0
    %660 = vmatprep.subr.mxu0 0.0
    %661 = vmatpush1.msra.mxu0 0.0
    %662 = vmatprep.subr.mxu0 0.0
    %663 = vmatpush1.msra.mxu0 0.0
    %664 = vmatprep.subr.mxu0 0.0
    %665 = vmatpush1.msra.mxu0 0.0
    %666 = vmatprep.subr.mxu0 0.0
    %667 = vmatpush1.msra.mxu0 0.0
    %668 = vmatprep.subr.mxu0 0.0
    %669 = vmatpush1.msra.mxu0 0.0
    %670 = vmatprep.subr.mxu0 0.0
    %671 = vmatpush1.msra.mxu0 0.0
    %672 = vmatprep.subr.mxu0 0.0
    %673 = vmatpush1.msra.mxu0 0.0
    %674 = vmatprep.subr.mxu0 0.0
    %675 = vmatpush1.msra.mxu0 0.0
    %676 = vmatprep.subr.mxu0 0.0
    %677 = vmatpush1.msra.mxu0 0.0
    %678 = vmatprep.subr.mxu0 0.0
    %679 = vmatpush1.msra.mxu0 0.0
    %680 = vmatprep.subr.mxu0 0.0
    %681 = vmatpush1.msra.mxu0 %v38
    %682 = vmatprep.subr.mxu0 0.0
    %683 = vmatpush2.msra.mxu0 0.0
    %684 = vmatprep.subr.mxu0 0.0
    %685 = vmatpush2.msra.mxu0 0.0
    %686 = vmatprep.subr.mxu0 0.0
    %687 = vmatpush2.msra.mxu0 0.0
    %688 = vmatprep.subr.mxu0 0.0
    %689 = vmatpush2.msra.mxu0 0.0
    %690 = vmatprep.subr.mxu0 0.0
    %691 = vmatpush2.msra.mxu0 0.0
    %692 = vmatprep.subr.mxu0 0.0
    %693 = vmatpush2.msra.mxu0 0.0
    %694 = vmatprep.subr.mxu0 0.0
    %695 = vmatpush2.msra.mxu0 0.0
    %696 = vmatprep.subr.mxu0 0.0
    %697 = vmatpush2.msra.mxu0 0.0
    %698 = vmatprep.subr.mxu0 0.0
    %699 = vmatpush2.msra.mxu0 0.0
    %700 = vmatprep.subr.mxu0 0.0
    %701 = vmatpush2.msra.mxu0 0.0
    %702 = vmatprep.subr.mxu0 0.0
    %703 = vmatpush2.msra.mxu0 0.0
    %704 = vmatprep.subr.mxu0 0.0
    %705 = vmatpush2.msra.mxu0 0.0
    %706 = vmatprep.subr.mxu0 0.0
    %707 = vmatpush2.msra.mxu0 0.0
    %708 = vmatprep.subr.mxu0 0.0
    %709 = vmatpush2.msra.mxu0 0.0
    %710 = vmatprep.subr.mxu0 0.0
    %711 = vmatpush2.msra.mxu0 0.0
    %712 = vmatprep.subr.mxu0 0.0
    %713 = vmatpush2.msra.mxu0 0.0
    %714 = vmatprep.mubr.f32.mxu0 0.0
    %715 = vmatmul.mubr.f32.gmra.mxu0 %v648
    %v716 = vpop.f32.mrf.mxu0
    %v717 = vadd.f32 0.0, %v716
    %v718 = vpop.f32.mrf.mxu0
    %719 = vdwg.mxu0
    %v724 = vrot.slane %v557, 7
    %v725 = vsel %vm287, %v724, %v477
    %v726 = vrot.slane %v637, 6
    %v727 = vsel %vm289, %v726, %v725
    %v728 = vrot.slane %v717, 5
    %v729 = vsel %vm291, %v728, %v727
    %vm731 = vcmask 257024
    %732 = vst.msk [vmem:[#allocation5] sm:$0xf] %vm731, %v729
    %v733 = vsel %vm287, %v487, %v406
    %v734 = vsel %vm289, %v567, %v733
    %v735 = vsel %vm291, %v647, %v734
    %737 = vst.msk [vmem:[#allocation6] sm:$0xf] %vm294, %v735
    // Predicated region
    $region22: #{tpu_custom_call.1} parent=1 // pred_check
      _
    $region23: #{tpu_custom_call.1} parent=1 // pred_check_branch
      %739 = sbr.rel (0) target = $region25
    $region24: #{tpu_custom_call.1} parent=1 // pred_region
      %s741 = ssub.s32 64, 64
      %742 = vsyncadd [#allocation4], %s741
      %s744 = sshll.u32 [#allocation5], 4
      %s745 = int_to_ptr.vmem [resolvable:$true] %s744
      %747 = dma.vmem_to_hbm [thread:$0]  %s745, 64, %s4, [#allocation4]
    $region25: #{tpu_custom_call.1} parent=1 // pred_fallthru
      _
    // Predicated region
    $region26: #{tpu_custom_call.1} parent=1 // pred_check
      _
    $region27: #{tpu_custom_call.1} parent=1 // pred_check_branch
      %749 = sbr.rel (0) target = $region29
    $region28: #{tpu_custom_call.1} parent=1 // pred_region
      %s751 = ssub.s32 64, 64
      %752 = vsyncadd [#allocation7], %s751
      %s754 = sshll.u32 [#allocation6], 4
      %s755 = int_to_ptr.vmem [resolvable:$true] %s754
      %757 = dma.vmem_to_hbm [thread:$0]  %s755, 64, %s5, [#allocation7]
    $region29: #{tpu_custom_call.1} parent=1 // pred_fallthru
      _
    // Predicated region
    $region30: #{tpu_custom_call.1} parent=1 // pred_check
      _
    $region31: #{tpu_custom_call.1} parent=1 // pred_check_branch
      %759 = sbr.rel (0) target = $region33
    $region32: #{tpu_custom_call.1} parent=1 // pred_region
      %760 = dma.done [#allocation4], 64
    $region33: #{tpu_custom_call.1} parent=1 // pred_fallthru
      _
    // Predicated region
    $region34: #{tpu_custom_call.1} parent=1 // pred_check
      _
    $region35: #{tpu_custom_call.1} parent=1 // pred_check_branch
      %762 = sbr.rel (0) target = $region37
    $region36: #{tpu_custom_call.1} parent=1 // pred_region
      %763 = dma.done [#allocation7], 64
    $region37: #{tpu_custom_call.1} parent=1 // pred_fallthru
      _
    %764 = vsyncpa [#allocation3], 1
    %765 = vsyncpa [#allocation4], 1
    %766 = vsyncpa [#allocation7], 1

</llo_original>
